<compile_context>
chip_gen: v7x
topology: tpu7x:2x2x1
jax: 0.10.0
libtpu: 0.0.40
codegen_flags: <defaults>
</compile_context>

<pallas_src>
import functools

import jax
import jax.numpy as jnp
from jax.experimental import pallas as pl
from jax.experimental.pallas import tpu as pltpu

BN_EPS = 1e-5
LANE = 128
SUBLANE = 8
VMEM_BUDGET = 48 * 1024 * 1024   # keep well under v7x's 64 MiB per-TC VMEM
VMEM_LIMIT = 50 * 1024 * 1024    # explicit scoped limit (default is 32 MiB)


def _round_up(a, b):
    return (a + b - 1) // b * b


def mlp_kernel(x_ref, w1_ref, b1_ref, w2_ref, b2_ref, w3_ref, b3_ref, o_ref):
    # x arrives in its original f32 HBM layout; cast to the MXU dtype in-VMEM.
    x = x_ref[...].astype(w1_ref.dtype)

    # Layer 1: Linear (eval-mode BN folded in the wrapper) + ReLU.
    h = jnp.dot(x, w1_ref[...], preferred_element_type=jnp.float32) + b1_ref[...]
    h = jnp.maximum(h, 0.0)
    # Dropout(0.5): identity in eval mode.

    # Layer 2: Linear (BN folded) + ReLU.
    h = jnp.dot(h.astype(w2_ref.dtype), w2_ref[...],
                preferred_element_type=jnp.float32) + b2_ref[...]
    h = jnp.maximum(h, 0.0)

    # Layer 3: Linear; output columns zero-padded to a lane-dense 128 slab.
    out = jnp.dot(h.astype(w3_ref.dtype), w3_ref[...],
                  preferred_element_type=jnp.float32) + b3_ref[...]
    o_ref[...] = out.astype(o_ref.dtype)


@functools.partial(jax.jit, static_argnames=("block_b", "use_bf16"))
def mlp_forward(x, params, *, block_b=2048, use_bf16=True):
    """x: [B, input_size] float32. params: dict of raw weights (see init_params).

    Returns [B, output_size] float32. Eval-mode semantics.
    """
    B, in_dim = x.shape
    out_dim = params["w3"].shape[1]

    # ---- Fold eval-mode BatchNorm into the preceding Linear layers (f32). ----
    scale1 = params["g1"] * jax.lax.rsqrt(params["v1"] + BN_EPS)   # [1, 128]
    w1f = params["w1"] * scale1                                    # [in, 128]
    b1f = (params["b1"] - params["m1"]) * scale1 + params["be1"]   # [1, 128]

    scale2 = params["g2"] * jax.lax.rsqrt(params["v2"] + BN_EPS)   # [1, 256]
    w2f = params["w2"] * scale2                                    # [128, 256]
    b2f = (params["b2"] - params["m2"]) * scale2 + params["be2"]   # [1, 256]

    w3f, b3f = params["w3"], params["b3"]

    # ---- Pad ONLY the (tiny) output weight/bias to a lane-dense 128 slab. ---
    out_pad = _round_up(max(out_dim, LANE), LANE)
    if out_pad != out_dim:
        w3f = jnp.pad(w3f, ((0, 0), (0, out_pad - out_dim)))
        b3f = jnp.pad(b3f, ((0, 0), (0, out_pad - out_dim)))

    # ---- dtypes: bf16 MXU + bf16 output slab (f32 accumulation in-kernel). --
    mxu_dtype = jnp.bfloat16 if use_bf16 else jnp.float32
    out_dtype = mxu_dtype
    w_bytes = 2 if use_bf16 else 4
    o_bytes = 2 if use_bf16 else 4

    w1k = w1f.astype(mxu_dtype)
    w2k = w2f.astype(mxu_dtype)
    w3k = w3f.astype(mxu_dtype)
    b1k = b1f.astype(jnp.float32)
    b2k = b2f.astype(jnp.float32)
    b3k = b3f.astype(jnp.float32)

    # ---- Block-size selection. -----------------------------------------------
    # (a) VMEM budget (double-buffered x/out blocks + intermediates + weights).
    weight_bytes = ((in_dim * 128 + 128 * 256 + 256 * out_pad) * w_bytes
                    + (128 + 256 + out_pad) * 4)
    per_row_bytes = (2 * in_dim * 4                     # x double-buffer (f32)
                     + 2 * out_pad * o_bytes            # out double-buffer
                     + (128 + 256) * (4 + w_bytes))     # h intermediates + casts
    cap_vmem = max(SUBLANE,
                   ((VMEM_BUDGET - weight_bytes) // per_row_bytes)
                   // SUBLANE * SUBLANE)
    # (b) >= 2 grid steps when B permits, so v7x's 2 TCs both get work.
    cap_two_steps = max(SUBLANE, _round_up(pl.cdiv(B, 2), SUBLANE))
    block_b = max(SUBLANE, min(block_b, cap_vmem, cap_two_steps))

    grid = (pl.cdiv(B, block_b),)   # no batch padding; ragged last block is OK

    def row_spec(cols):
        return pl.BlockSpec((block_b, cols), lambda i: (i, 0))

    def full_spec(shape):
        return pl.BlockSpec(shape, lambda i: (0, 0))

    args = (x, w1k, b1k, w2k, b2k, w3k, b3k)
    in_specs = [row_spec(in_dim)] + [full_spec(a.shape) for a in args[1:]]

    out_slab = pl.pallas_call(
        mlp_kernel,
        out_shape=jax.ShapeDtypeStruct((B, out_pad), out_dtype),
        grid=grid,
        in_specs=in_specs,
        out_specs=row_spec(out_pad),
        compiler_params=pltpu.CompilerParams(
            dimension_semantics=("parallel",),
            vmem_limit_bytes=VMEM_LIMIT),
    )(*args)

    return out_slab[:, :out_dim].astype(jnp.float32)


def init_params(key, input_size, output_size=2):
    """Deterministic synthetic init mirroring the PyTorch module's shapes.

    Linear weights stored transposed: [in, out]. All 1-D params stored as
    [1, N] so they broadcast over the batch rows.
    """
    ks = jax.random.split(key, 12)
    h1, h2 = 128, 256

    def uniform(k, shape, fan_in):
        bound = 1.0 / jnp.sqrt(float(fan_in))
        return jax.random.uniform(k, shape, jnp.float32, -bound, bound)

    params = {
        # Linear(input_size, 128)
        "w1": uniform(ks[0], (input_size, h1), input_size),
        "b1": uniform(ks[1], (1, h1), input_size),
        # BatchNorm1d(128) (eval: running stats)
        "g1": 1.0 + 0.1 * jax.random.normal(ks[2], (1, h1), jnp.float32),
        "be1": 0.1 * jax.random.normal(ks[3], (1, h1), jnp.float32),
        "m1": 0.1 * jax.random.normal(ks[4], (1, h1), jnp.float32),
        "v1": jnp.abs(1.0 + 0.1 * jax.random.normal(ks[5], (1, h1), jnp.float32)),
        # Linear(128, 256)
        "w2": uniform(ks[6], (h1, h2), h1),
        "b2": uniform(ks[7], (1, h2), h1),
        # BatchNorm1d(256)
        "g2": 1.0 + 0.1 * jax.random.normal(ks[8], (1, h2), jnp.float32),
        "be2": 0.1 * jax.random.normal(ks[9], (1, h2), jnp.float32),
        "m2": 0.1 * jax.random.normal(ks[10], (1, h2), jnp.float32),
        "v2": jnp.abs(1.0 + 0.1 * jax.random.normal(ks[11], (1, h2), jnp.float32)),
        # Linear(256, output_size)
        "w3": uniform(jax.random.fold_in(key, 100), (h2, output_size), h2),
        "b3": uniform(jax.random.fold_in(key, 101), (1, output_size), h2),
    }
    return params


def mlp_reference(x, p):
    """Pure-JAX f32 reference (eval mode), un-folded BN."""
    h = x @ p["w1"] + p["b1"]
    h = (h - p["m1"]) * jax.lax.rsqrt(p["v1"] + BN_EPS) * p["g1"] + p["be1"]
    h = jnp.maximum(h, 0.0)
    h = h @ p["w2"] + p["b2"]
    h = (h - p["m2"]) * jax.lax.rsqrt(p["v2"] + BN_EPS) * p["g2"] + p["be2"]
    h = jnp.maximum(h, 0.0)
    return h @ p["w3"] + p["b3"]


if __name__ == "__main__":
    key = jax.random.PRNGKey(0)
    k_x, k_p = jax.random.split(key)

    batch = 8
    input_size = 32
    output_size = 2

    x = jax.random.normal(k_x, (batch, input_size), jnp.float32)
    params = init_params(k_p, input_size, output_size)

    ref = mlp_reference(x, params)

    # f32-MXU path: should match the reference tightly (BN folding ~1e-6).
    out_f32 = jax.block_until_ready(mlp_forward(x, params, use_bf16=False))
    assert out_f32.shape == (batch, output_size)
    assert jnp.allclose(out_f32, ref, atol=1e-4, rtol=1e-4), "f32 path mismatch"

    # bf16-MXU / bf16-writeback path (default, fast on v5e/v6e/v7x).
    out_bf16 = jax.block_until_ready(mlp_forward(x, params, use_bf16=True))
    assert out_bf16.shape == (batch, output_size)
    assert jnp.allclose(out_bf16, ref, atol=5e-2, rtol=5e-2), "bf16 path mismatch"

    # Exercise a ragged multi-step grid (B not a multiple of block_b, >=2 steps).
    x_big = jax.random.normal(jax.random.fold_in(key, 7), (1037, input_size),
                              jnp.float32)
    ref_big = mlp_reference(x_big, params)
    out_big = jax.block_until_ready(
        mlp_forward(x_big, params, block_b=512, use_bf16=True))
    assert out_big.shape == (1037, output_size)
    assert jnp.allclose(out_big, ref_big, atol=5e-2, rtol=5e-2), "ragged mismatch"

    print("KERNEL_OK")
</pallas_src>

<mosaic_0001>
module attributes {stable_mosaic.version = 11 : i64} {
  func.func @mlp_kernel(%arg0: i32, %arg1: memref<8x32xf32, #tpu.memory_space<vmem>>, %arg2: memref<32x128xf32, #tpu.memory_space<vmem>>, %arg3: memref<1x128xf32, #tpu.memory_space<vmem>>, %arg4: memref<128x256xf32, #tpu.memory_space<vmem>>, %arg5: memref<1x256xf32, #tpu.memory_space<vmem>>, %arg6: memref<256x128xf32, #tpu.memory_space<vmem>>, %arg7: memref<1x128xf32, #tpu.memory_space<vmem>>, %arg8: memref<8x128xf32, #tpu.memory_space<vmem>>) attributes {dimension_semantics = [#tpu.dimension_semantics<parallel>], iteration_bounds = array<i64: 1>, scalar_prefetch = 0 : i64, scratch_operands = 0 : i64, tpu.core_type = #tpu.core_type<tc>, window_params = [{transform_indices = @transform_0, window_bounds = array<i64: 8, 32>}, {pipeline_mode = #tpu.pipeline_mode<synchronous>, transform_indices = @transform_1, window_bounds = array<i64: 32, 128>}, {pipeline_mode = #tpu.pipeline_mode<synchronous>, transform_indices = @transform_2, window_bounds = array<i64: 1, 128>}, {pipeline_mode = #tpu.pipeline_mode<synchronous>, transform_indices = @transform_3, window_bounds = array<i64: 128, 256>}, {pipeline_mode = #tpu.pipeline_mode<synchronous>, transform_indices = @transform_4, window_bounds = array<i64: 1, 256>}, {pipeline_mode = #tpu.pipeline_mode<synchronous>, transform_indices = @transform_5, window_bounds = array<i64: 256, 128>}, {pipeline_mode = #tpu.pipeline_mode<synchronous>, transform_indices = @transform_6, window_bounds = array<i64: 1, 128>}, {transform_indices = @transform_7, window_bounds = array<i64: 8, 128>}]} {
    %c0 = arith.constant 0 : index
    %c0_0 = arith.constant 0 : index
    %0 = vector.load %arg1[%c0, %c0_0] : memref<8x32xf32, #tpu.memory_space<vmem>>, vector<8x32xf32>
    %c0_1 = arith.constant 0 : index
    %c0_2 = arith.constant 0 : index
    %1 = vector.load %arg2[%c0_1, %c0_2] : memref<32x128xf32, #tpu.memory_space<vmem>>, vector<32x128xf32>
    %cst = arith.constant dense<0.000000e+00> : vector<8x128xf32>
    %2 = tpu.matmul %0, %1, %cst {dimension_numbers = #tpu.dot_dimension_numbers<[1], [0], [0], [1], [0, 0, 1, 1], [], []>} : vector<8x32xf32>, vector<32x128xf32>, vector<8x128xf32> -> vector<8x128xf32>
    %c0_3 = arith.constant 0 : index
    %c0_4 = arith.constant 0 : index
    %3 = vector.load %arg3[%c0_3, %c0_4] : memref<1x128xf32, #tpu.memory_space<vmem>>, vector<1x128xf32>
    %4 = vector.broadcast %3 : vector<1x128xf32> to vector<8x128xf32>
    %5 = arith.addf %2, %4 : vector<8x128xf32>
    %cst_5 = arith.constant 0.000000e+00 : f32
    %6 = vector.broadcast %cst_5 : f32 to vector<8x128xf32>
    %7 = arith.maximumf %5, %6 : vector<8x128xf32>
    %c0_6 = arith.constant 0 : index
    %c0_7 = arith.constant 0 : index
    %8 = vector.load %arg4[%c0_6, %c0_7] : memref<128x256xf32, #tpu.memory_space<vmem>>, vector<128x256xf32>
    %cst_8 = arith.constant dense<0.000000e+00> : vector<8x256xf32>
    %9 = tpu.matmul %7, %8, %cst_8 {dimension_numbers = #tpu.dot_dimension_numbers<[1], [0], [0], [1], [0, 0, 1, 1], [], []>} : vector<8x128xf32>, vector<128x256xf32>, vector<8x256xf32> -> vector<8x256xf32>
    %c0_9 = arith.constant 0 : index
    %c0_10 = arith.constant 0 : index
    %10 = vector.load %arg5[%c0_9, %c0_10] : memref<1x256xf32, #tpu.memory_space<vmem>>, vector<1x256xf32>
    %11 = vector.broadcast %10 : vector<1x256xf32> to vector<8x256xf32>
    %12 = arith.addf %9, %11 : vector<8x256xf32>
    %cst_11 = arith.constant 0.000000e+00 : f32
    %13 = vector.broadcast %cst_11 : f32 to vector<8x256xf32>
    %14 = arith.maximumf %12, %13 : vector<8x256xf32>
    %c0_12 = arith.constant 0 : index
    %c0_13 = arith.constant 0 : index
    %15 = vector.load %arg6[%c0_12, %c0_13] : memref<256x128xf32, #tpu.memory_space<vmem>>, vector<256x128xf32>
    %cst_14 = arith.constant dense<0.000000e+00> : vector<8x128xf32>
    %16 = tpu.matmul %14, %15, %cst_14 {dimension_numbers = #tpu.dot_dimension_numbers<[1], [0], [0], [1], [0, 0, 1, 1], [], []>} : vector<8x256xf32>, vector<256x128xf32>, vector<8x128xf32> -> vector<8x128xf32>
    %c0_15 = arith.constant 0 : index
    %c0_16 = arith.constant 0 : index
    %17 = vector.load %arg7[%c0_15, %c0_16] : memref<1x128xf32, #tpu.memory_space<vmem>>, vector<1x128xf32>
    %18 = vector.broadcast %17 : vector<1x128xf32> to vector<8x128xf32>
    %19 = arith.addf %16, %18 : vector<8x128xf32>
    %c0_17 = arith.constant 0 : index
    %c0_18 = arith.constant 0 : index
    %20 = vector.load %arg8[%c0_17, %c0_18] : memref<8x128xf32, #tpu.memory_space<vmem>>, vector<8x128xf32>
    tpu.vector_store %arg8[%c0_17, %c0_18], %19 {strides = array<i32>} : memref<8x128xf32, #tpu.memory_space<vmem>>, vector<8x128xf32>,
    return
  }
  func.func @transform_0(%arg0: i32) -> (i32, i32) {
    %c0_i32 = arith.constant 0 : i32
    %c0_i32_0 = arith.constant 0 : i32
    return %arg0, %c0_i32 : i32, i32
  }
  func.func @transform_1(%arg0: i32) -> (i32, i32) {
    %c0_i32 = arith.constant 0 : i32
    %c0_i32_0 = arith.constant 0 : i32
    %c0_i32_1 = arith.constant 0 : i32
    return %c0_i32, %c0_i32_0 : i32, i32
  }
  func.func @transform_2(%arg0: i32) -> (i32, i32) {
    %c0_i32 = arith.constant 0 : i32
    %c0_i32_0 = arith.constant 0 : i32
    %c0_i32_1 = arith.constant 0 : i32
    return %c0_i32, %c0_i32_0 : i32, i32
  }
  func.func @transform_3(%arg0: i32) -> (i32, i32) {
    %c0_i32 = arith.constant 0 : i32
    %c0_i32_0 = arith.constant 0 : i32
    %c0_i32_1 = arith.constant 0 : i32
    return %c0_i32, %c0_i32_0 : i32, i32
  }
  func.func @transform_4(%arg0: i32) -> (i32, i32) {
    %c0_i32 = arith.constant 0 : i32
    %c0_i32_0 = arith.constant 0 : i32
    %c0_i32_1 = arith.constant 0 : i32
    return %c0_i32, %c0_i32_0 : i32, i32
  }
  func.func @transform_5(%arg0: i32) -> (i32, i32) {
    %c0_i32 = arith.constant 0 : i32
    %c0_i32_0 = arith.constant 0 : i32
    %c0_i32_1 = arith.constant 0 : i32
    return %c0_i32, %c0_i32_0 : i32, i32
  }
  func.func @transform_6(%arg0: i32) -> (i32, i32) {
    %c0_i32 = arith.constant 0 : i32
    %c0_i32_0 = arith.constant 0 : i32
    %c0_i32_1 = arith.constant 0 : i32
    return %c0_i32, %c0_i32_0 : i32, i32
  }
  func.func @transform_7(%arg0: i32) -> (i32, i32) {
    %c0_i32 = arith.constant 0 : i32
    %c0_i32_0 = arith.constant 0 : i32
    return %arg0, %c0_i32 : i32, i32
  }
}

</mosaic_0001>

<llo_original>
// kernel: mlp_forward.1
$region0: #{mlp_forward.1}
  #allocation0 [shape = 'u32[]', space=smem, size = 0x4, offset = 0x4, fixed_abs, tag = 'smem constant byte address 0x4 - core index']
  #allocation1 [shape = 'u32[144,128]{1,0:T(1,128)}', space=vmem, size = 0x12000, scoped, tag = 'internal scratch']
  %s0 = inlined_call_operand.vmem [shape: f32[8,32], index: 0, kind: input, shape index: {}]
  %s1 = inlined_call_operand.vmem [shape: f32[32,128], index: 1, kind: input, shape index: {}]
  %s2 = inlined_call_operand.vmem [shape: f32[1,128], index: 2, kind: input, shape index: {}]
  %s3 = inlined_call_operand.vmem [shape: f32[128,256], index: 3, kind: input, shape index: {}]
  %s4 = inlined_call_operand.vmem [shape: f32[1,256], index: 4, kind: input, shape index: {}]
  %s5 = inlined_call_operand.vmem [shape: f32[256,128], index: 5, kind: input, shape index: {}]
  %s6 = inlined_call_operand.vmem [shape: f32[1,128], index: 6, kind: input, shape index: {}]
  %s7 = inlined_call_operand.vmem [shape: f32[8,128], index: 7, kind: output, shape index: {}]
  %s8 = sld [smem:[#allocation0]]
  $region38: #{mlp_forward.1} parent=0
    _
  %s10 = ssub.s32 1, %s8
  %s11 = scalar_select 0, %s10, %s8
  // Predicated region
  $region2: #{mlp_forward.1} parent=0 // pred_check
    _
  $region3: #{mlp_forward.1} parent=0 // pred_check_branch
    %13 = sbr.rel (0) target = $region5
  $region4: #{mlp_forward.1} parent=0 // pred_region
    _
  $region5: #{mlp_forward.1} parent=0 // pred_fallthru
    _
  // Predicated region
  $region6: #{mlp_forward.1} parent=0 // pred_check
    _
  $region7: #{mlp_forward.1} parent=0 // pred_check_branch
    %15 = sbr.rel (0) target = $region9
  $region8: #{mlp_forward.1} parent=0 // pred_region
    _
  $region9: #{mlp_forward.1} parent=0 // pred_fallthru
    _
  // Predicated region
  $region10: #{mlp_forward.1} parent=0 // pred_check
    _
  $region11: #{mlp_forward.1} parent=0 // pred_check_branch
    %17 = sbr.rel (0) target = $region13
  $region12: #{mlp_forward.1} parent=0 // pred_region
    _
  $region13: #{mlp_forward.1} parent=0 // pred_fallthru
    _
  // Predicated region
  $region14: #{mlp_forward.1} parent=0 // pred_check
    _
  $region15: #{mlp_forward.1} parent=0 // pred_check_branch
    %19 = sbr.rel (0) target = $region17
  $region16: #{mlp_forward.1} parent=0 // pred_region
    _
  $region17: #{mlp_forward.1} parent=0 // pred_fallthru
    _
  // Predicated region
  $region18: #{mlp_forward.1} parent=0 // pred_check
    _
  $region19: #{mlp_forward.1} parent=0 // pred_check_branch
    %21 = sbr.rel (0) target = $region21
  $region20: #{mlp_forward.1} parent=0 // pred_region
    _
  $region21: #{mlp_forward.1} parent=0 // pred_fallthru
    _
  // Predicated region
  $region22: #{mlp_forward.1} parent=0 // pred_check
    _
  $region23: #{mlp_forward.1} parent=0 // pred_check_branch
    %23 = sbr.rel (0) target = $region25
  $region24: #{mlp_forward.1} parent=0 // pred_region
    _
  $region25: #{mlp_forward.1} parent=0 // pred_fallthru
    _
  // Predicated region
  $region26: #{mlp_forward.1} parent=0 // pred_check
    _
  $region27: #{mlp_forward.1} parent=0 // pred_check_branch
    %25 = sbr.rel (0) target = $region29
  $region28: #{mlp_forward.1} parent=0 // pred_region
    _
  $region29: #{mlp_forward.1} parent=0 // pred_fallthru
    _
  %v26 = vld [vmem:[%s0] sm:$0xff]
  %v27 = vld [vmem:[%s1] sm:$0xff]
  %v28 = vld [vmem:[%s1 + $0x8] sm:$0xff]
  %v29 = vld [vmem:[%s1 + $0x10] sm:$0xff]
  %v30 = vld [vmem:[%s1 + $0x18] sm:$0xff]
  %v31 = vld [vmem:[%s2] sm:$0x1]
  %v33 = vlaneseq
  %v34 = vshrl.u32 %v33, 7
  %v35 = vsub.s32 0, %v34
  %v36 = vrot.slane %v31, %v35
  %vm38 = vcmask 261120
  %v40 = vsel %vm38, %v26, 0
  %42 = vmatprep.subr.mxu0 0.0
  %43 = vmatpush1.msra.mxu0 %v27
  %44 = vmatprep.subr.mxu0 0.0
  %45 = vmatpush1.msra.mxu0 %v28
  %46 = vmatprep.subr.mxu0 0.0
  %47 = vmatpush1.msra.mxu0 %v29
  %48 = vmatprep.subr.mxu0 0.0
  %49 = vmatpush1.msra.mxu0 %v30
  %50 = vmatprep.subr.mxu0 0.0
  %51 = vmatpush1.msra.mxu0 0.0
  %52 = vmatprep.subr.mxu0 0.0
  %53 = vmatpush1.msra.mxu0 0.0
  %54 = vmatprep.subr.mxu0 0.0
  %55 = vmatpush1.msra.mxu0 0.0
  %56 = vmatprep.subr.mxu0 0.0
  %57 = vmatpush1.msra.mxu0 0.0
  %58 = vmatprep.subr.mxu0 0.0
  %59 = vmatpush1.msra.mxu0 0.0
  %60 = vmatprep.subr.mxu0 0.0
  %61 = vmatpush1.msra.mxu0 0.0
  %62 = vmatprep.subr.mxu0 0.0
  %63 = vmatpush1.msra.mxu0 0.0
  %64 = vmatprep.subr.mxu0 0.0
  %65 = vmatpush1.msra.mxu0 0.0
  %66 = vmatprep.subr.mxu0 0.0
  %67 = vmatpush1.msra.mxu0 0.0
  %68 = vmatprep.subr.mxu0 0.0
  %69 = vmatpush1.msra.mxu0 0.0
  %70 = vmatprep.subr.mxu0 0.0
  %71 = vmatpush1.msra.mxu0 0.0
  %72 = vmatprep.subr.mxu0 0.0
  %73 = vmatpush1.msra.mxu0 0.0
  %74 = vmatprep.subr.mxu0 0.0
  %75 = vmatpush1.msra.mxu0 0.0
  %76 = vmatprep.subr.mxu0 0.0
  %77 = vmatpush1.msra.mxu0 0.0
  %78 = vmatprep.subr.mxu0 0.0
  %79 = vmatpush1.msra.mxu0 0.0
  %80 = vmatprep.subr.mxu0 0.0
  %81 = vmatpush1.msra.mxu0 0.0
  %82 = vmatprep.subr.mxu0 0.0
  %83 = vmatpush1.msra.mxu0 0.0
  %84 = vmatprep.subr.mxu0 0.0
  %85 = vmatpush1.msra.mxu0 0.0
  %86 = vmatprep.subr.mxu0 0.0
  %87 = vmatpush1.msra.mxu0 0.0
  %88 = vmatprep.subr.mxu0 0.0
  %89 = vmatpush1.msra.mxu0 0.0
  %90 = vmatprep.subr.mxu0 0.0
  %91 = vmatpush1.msra.mxu0 0.0
  %92 = vmatprep.subr.mxu0 0.0
  %93 = vmatpush1.msra.mxu0 0.0
  %94 = vmatprep.subr.mxu0 0.0
  %95 = vmatpush1.msra.mxu0 0.0
  %96 = vmatprep.subr.mxu0 0.0
  %97 = vmatpush1.msra.mxu0 0.0
  %98 = vmatprep.subr.mxu0 0.0
  %99 = vmatpush1.msra.mxu0 0.0
  %100 = vmatprep.subr.mxu0 0.0
  %101 = vmatpush1.msra.mxu0 0.0
  %102 = vmatprep.subr.mxu0 0.0
  %103 = vmatpush1.msra.mxu0 0.0
  %104 = vmatprep.subr.mxu0 0.0
  %105 = vmatpush1.msra.mxu0 0.0
  %106 = vmatprep.mubr.f32.mxu0 0.0
  %107 = vmatmul.mubr.f32.gmra.mrb[0].mxu0 %v40
  %v108 = vpop.f32.mrb[0].mxu0
  %v109 = vadd.f32 %v36, %v108
  %v110 = vpop.f32.mrb[0].mxu0
  %111 = vdwg.mxu0
  %v112 = vmax.f32 %v109, 0.0
  %v113 = vld [vmem:[%s3] sm:$0xff]
  %v114 = vld [vmem:[%s3 + $0x8] sm:$0xff]
  %v115 = vld [vmem:[%s3 + $0x10] sm:$0xff]
  %v116 = vld [vmem:[%s3 + $0x18] sm:$0xff]
  %v117 = vld [vmem:[%s3 + $0x20] sm:$0xff]
  %v118 = vld [vmem:[%s3 + $0x28] sm:$0xff]
  %v119 = vld [vmem:[%s3 + $0x30] sm:$0xff]
  %v120 = vld [vmem:[%s3 + $0x38] sm:$0xff]
  %v121 = vld [vmem:[%s3 + $0x40] sm:$0xff]
  %v122 = vld [vmem:[%s3 + $0x48] sm:$0xff]
  %v123 = vld [vmem:[%s3 + $0x50] sm:$0xff]
  %v124 = vld [vmem:[%s3 + $0x58] sm:$0xff]
  %v125 = vld [vmem:[%s3 + $0x60] sm:$0xff]
  %v126 = vld [vmem:[%s3 + $0x68] sm:$0xff]
  %v127 = vld [vmem:[%s3 + $0x70] sm:$0xff]
  %v128 = vld [vmem:[%s3 + $0x78] sm:$0xff]
  %v129 = vld [vmem:[%s3 + $0x80] sm:$0xff]
  %v130 = vld [vmem:[%s3 + $0x88] sm:$0xff]
  %v131 = vld [vmem:[%s3 + $0x90] sm:$0xff]
  %v132 = vld [vmem:[%s3 + $0x98] sm:$0xff]
  %v133 = vld [vmem:[%s3 + $0xa0] sm:$0xff]
  %v134 = vld [vmem:[%s3 + $0xa8] sm:$0xff]
  %v135 = vld [vmem:[%s3 + $0xb0] sm:$0xff]
  %v136 = vld [vmem:[%s3 + $0xb8] sm:$0xff]
  %v137 = vld [vmem:[%s3 + $0xc0] sm:$0xff]
  %v138 = vld [vmem:[%s3 + $0xc8] sm:$0xff]
  %v139 = vld [vmem:[%s3 + $0xd0] sm:$0xff]
  %v140 = vld [vmem:[%s3 + $0xd8] sm:$0xff]
  %v141 = vld [vmem:[%s3 + $0xe0] sm:$0xff]
  %v142 = vld [vmem:[%s3 + $0xe8] sm:$0xff]
  %v143 = vld [vmem:[%s3 + $0xf0] sm:$0xff]
  %v144 = vld [vmem:[%s3 + $0xf8] sm:$0xff]
  %v145 = vld [vmem:[%s4] sm:$0x3]
  %v147 = vlaneseq
  %v148 = vshrl.u32 %v147, 7
  %v149 = vsub.s32 0, %v148
  %v150 = vrot.slane %v145, %v149
  %v151 = vlaneseq
  %v152 = vshrl.u32 %v151, 7
  %v153 = vsub.s32 1, %v152
  %v154 = vrot.slane %v145, %v153
  %157 = vmatprep.subr.mxu0 %v114
  %158 = vmatpush1.msra.mxu0 %v113
  %159 = vmatprep.subr.mxu0 %v116
  %160 = vmatpush1.msra.mxu0 %v115
  %161 = vmatprep.subr.mxu0 %v118
  %162 = vmatpush1.msra.mxu0 %v117
  %163 = vmatprep.subr.mxu0 %v120
  %164 = vmatpush1.msra.mxu0 %v119
  %165 = vmatprep.subr.mxu0 %v122
  %166 = vmatpush1.msra.mxu0 %v121
  %167 = vmatprep.subr.mxu0 %v124
  %168 = vmatpush1.msra.mxu0 %v123
  %169 = vmatprep.subr.mxu0 %v126
  %170 = vmatpush1.msra.mxu0 %v125
  %171 = vmatprep.subr.mxu0 %v128
  %172 = vmatpush1.msra.mxu0 %v127
  %173 = vmatprep.subr.mxu0 %v130
  %174 = vmatpush1.msra.mxu0 %v129
  %175 = vmatprep.subr.mxu0 %v132
  %176 = vmatpush1.msra.mxu0 %v131
  %177 = vmatprep.subr.mxu0 %v134
  %178 = vmatpush1.msra.mxu0 %v133
  %179 = vmatprep.subr.mxu0 %v136
  %180 = vmatpush1.msra.mxu0 %v135
  %181 = vmatprep.subr.mxu0 %v138
  %182 = vmatpush1.msra.mxu0 %v137
  %183 = vmatprep.subr.mxu0 %v140
  %184 = vmatpush1.msra.mxu0 %v139
  %185 = vmatprep.subr.mxu0 %v142
  %186 = vmatpush1.msra.mxu0 %v141
  %187 = vmatprep.subr.mxu0 %v144
  %188 = vmatpush1.msra.mxu0 %v143
  %189 = vmatprep.subr.mxu0 0.0
  %190 = vmatpush1.msra.mxu0 0.0
  %191 = vmatprep.subr.mxu0 0.0
  %192 = vmatpush1.msra.mxu0 0.0
  %193 = vmatprep.subr.mxu0 0.0
  %194 = vmatpush1.msra.mxu0 0.0
  %195 = vmatprep.subr.mxu0 0.0
  %196 = vmatpush1.msra.mxu0 0.0
  %197 = vmatprep.subr.mxu0 0.0
  %198 = vmatpush1.msra.mxu0 0.0
  %199 = vmatprep.subr.mxu0 0.0
  %200 = vmatpush1.msra.mxu0 0.0
  %201 = vmatprep.subr.mxu0 0.0
  %202 = vmatpush1.msra.mxu0 0.0
  %203 = vmatprep.subr.mxu0 0.0
  %204 = vmatpush1.msra.mxu0 0.0
  %205 = vmatprep.subr.mxu0 0.0
  %206 = vmatpush1.msra.mxu0 0.0
  %207 = vmatprep.subr.mxu0 0.0
  %208 = vmatpush1.msra.mxu0 0.0
  %209 = vmatprep.subr.mxu0 0.0
  %210 = vmatpush1.msra.mxu0 0.0
  %211 = vmatprep.subr.mxu0 0.0
  %212 = vmatpush1.msra.mxu0 0.0
  %213 = vmatprep.subr.mxu0 0.0
  %214 = vmatpush1.msra.mxu0 0.0
  %215 = vmatprep.subr.mxu0 0.0
  %216 = vmatpush1.msra.mxu0 0.0
  %217 = vmatprep.subr.mxu0 0.0
  %218 = vmatpush1.msra.mxu0 0.0
  %219 = vmatprep.subr.mxu0 0.0
  %220 = vmatpush1.msra.mxu0 0.0
  %221 = vmatprep.mubr.f32.mxu0 0.0
  %222 = vmatmul.mubr.f32.gmra.mrb[0].mxu0 %v112
  %v223 = vpop.f32.mrb[0].mxu0
  %v224 = vadd.f32 %v150, %v223
  %v225 = vpop.f32.mrb[0].mxu0
  %v226 = vadd.f32 %v154, %v225
  %227 = vdwg.mxu0
  %v228 = vmax.f32 %v224, 0.0
  %v229 = vmax.f32 %v226, 0.0
  %v230 = vld [vmem:[%s5] sm:$0xff]
  %v231 = vld [vmem:[%s5 + $0x8] sm:$0xff]
  %v232 = vld [vmem:[%s5 + $0x10] sm:$0xff]
  %v233 = vld [vmem:[%s5 + $0x18] sm:$0xff]
  %v234 = vld [vmem:[%s5 + $0x20] sm:$0xff]
  %v235 = vld [vmem:[%s5 + $0x28] sm:$0xff]
  %v236 = vld [vmem:[%s5 + $0x30] sm:$0xff]
  %v237 = vld [vmem:[%s5 + $0x38] sm:$0xff]
  %v238 = vld [vmem:[%s5 + $0x40] sm:$0xff]
  %v239 = vld [vmem:[%s5 + $0x48] sm:$0xff]
  %v240 = vld [vmem:[%s5 + $0x50] sm:$0xff]
  %v241 = vld [vmem:[%s5 + $0x58] sm:$0xff]
  %v242 = vld [vmem:[%s5 + $0x60] sm:$0xff]
  %v243 = vld [vmem:[%s5 + $0x68] sm:$0xff]
  %v244 = vld [vmem:[%s5 + $0x70] sm:$0xff]
  %v245 = vld [vmem:[%s5 + $0x78] sm:$0xff]
  %v246 = vld [vmem:[%s5 + $0x80] sm:$0xff]
  %v247 = vld [vmem:[%s5 + $0x88] sm:$0xff]
  %v248 = vld [vmem:[%s5 + $0x90] sm:$0xff]
  %v249 = vld [vmem:[%s5 + $0x98] sm:$0xff]
  %v250 = vld [vmem:[%s5 + $0xa0] sm:$0xff]
  %v251 = vld [vmem:[%s5 + $0xa8] sm:$0xff]
  %v252 = vld [vmem:[%s5 + $0xb0] sm:$0xff]
  %v253 = vld [vmem:[%s5 + $0xb8] sm:$0xff]
  %v254 = vld [vmem:[%s5 + $0xc0] sm:$0xff]
  %v255 = vld [vmem:[%s5 + $0xc8] sm:$0xff]
  %v256 = vld [vmem:[%s5 + $0xd0] sm:$0xff]
  %v257 = vld [vmem:[%s5 + $0xd8] sm:$0xff]
  %v258 = vld [vmem:[%s5 + $0xe0] sm:$0xff]
  %v259 = vld [vmem:[%s5 + $0xe8] sm:$0xff]
  %v260 = vld [vmem:[%s5 + $0xf0] sm:$0xff]
  %v261 = vld [vmem:[%s5 + $0xf8] sm:$0xff]
  %v262 = vld [vmem:[%s6] sm:$0x1]
  %v264 = vlaneseq
  %v265 = vshrl.u32 %v264, 7
  %v266 = vsub.s32 0, %v265
  %v267 = vrot.slane %v262, %v266
  %269 = vmatprep.subr.mxu0 0.0
  %270 = vmatpush1.msra.mxu0 %v230
  %271 = vmatprep.subr.mxu0 0.0
  %272 = vmatpush1.msra.mxu0 %v231
  %273 = vmatprep.subr.mxu0 0.0
  %274 = vmatpush1.msra.mxu0 %v232
  %275 = vmatprep.subr.mxu0 0.0
  %276 = vmatpush1.msra.mxu0 %v233
  %277 = vmatprep.subr.mxu0 0.0
  %278 = vmatpush1.msra.mxu0 %v234
  %279 = vmatprep.subr.mxu0 0.0
  %280 = vmatpush1.msra.mxu0 %v235
  %281 = vmatprep.subr.mxu0 0.0
  %282 = vmatpush1.msra.mxu0 %v236
  %283 = vmatprep.subr.mxu0 0.0
  %284 = vmatpush1.msra.mxu0 %v237
  %285 = vmatprep.subr.mxu0 0.0
  %286 = vmatpush1.msra.mxu0 %v238
  %287 = vmatprep.subr.mxu0 0.0
  %288 = vmatpush1.msra.mxu0 %v239
  %289 = vmatprep.subr.mxu0 0.0
  %290 = vmatpush1.msra.mxu0 %v240
  %291 = vmatprep.subr.mxu0 0.0
  %292 = vmatpush1.msra.mxu0 %v241
  %293 = vmatprep.subr.mxu0 0.0
  %294 = vmatpush1.msra.mxu0 %v242
  %295 = vmatprep.subr.mxu0 0.0
  %296 = vmatpush1.msra.mxu0 %v243
  %297 = vmatprep.subr.mxu0 0.0
  %298 = vmatpush1.msra.mxu0 %v244
  %299 = vmatprep.subr.mxu0 0.0
  %300 = vmatpush1.msra.mxu0 %v245
  %301 = vmatprep.subr.mxu0 0.0
  %302 = vmatpush1.msra.mxu0 %v246
  %303 = vmatprep.subr.mxu0 0.0
  %304 = vmatpush1.msra.mxu0 %v247
  %305 = vmatprep.subr.mxu0 0.0
  %306 = vmatpush1.msra.mxu0 %v248
  %307 = vmatprep.subr.mxu0 0.0
  %308 = vmatpush1.msra.mxu0 %v249
  %309 = vmatprep.subr.mxu0 0.0
  %310 = vmatpush1.msra.mxu0 %v250
  %311 = vmatprep.subr.mxu0 0.0
  %312 = vmatpush1.msra.mxu0 %v251
  %313 = vmatprep.subr.mxu0 0.0
  %314 = vmatpush1.msra.mxu0 %v252
  %315 = vmatprep.subr.mxu0 0.0
  %316 = vmatpush1.msra.mxu0 %v253
  %317 = vmatprep.subr.mxu0 0.0
  %318 = vmatpush1.msra.mxu0 %v254
  %319 = vmatprep.subr.mxu0 0.0
  %320 = vmatpush1.msra.mxu0 %v255
  %321 = vmatprep.subr.mxu0 0.0
  %322 = vmatpush1.msra.mxu0 %v256
  %323 = vmatprep.subr.mxu0 0.0
  %324 = vmatpush1.msra.mxu0 %v257
  %325 = vmatprep.subr.mxu0 0.0
  %326 = vmatpush1.msra.mxu0 %v258
  %327 = vmatprep.subr.mxu0 0.0
  %328 = vmatpush1.msra.mxu0 %v259
  %329 = vmatprep.subr.mxu0 0.0
  %330 = vmatpush1.msra.mxu0 %v260
  %331 = vmatprep.subr.mxu0 0.0
  %332 = vmatpush1.msra.mxu0 %v261
  %333 = vmatprep.mubr.f32.mxu0 %v229
  %334 = vmatmul.mubr.f32.gmra.mrb[0].mxu0 %v228
  %v335 = vpop.f32.mrb[0].mxu0
  %v336 = vadd.f32 %v267, %v335
  %v337 = vpop.f32.mrb[0].mxu0
  %338 = vdwg.mxu0
  %339 = vst [vmem:[%s7] sm:$0xff] %v336
  // Predicated region
  $region30: #{mlp_forward.1} parent=0 // pred_check
    _
  $region31: #{mlp_forward.1} parent=0 // pred_check_branch
    %341 = sbr.rel (0) target = $region33
  $region32: #{mlp_forward.1} parent=0 // pred_region
    _
  $region33: #{mlp_forward.1} parent=0 // pred_fallthru
    _
  // Predicated region
  $region34: #{mlp_forward.1} parent=0 // pred_check
    _
  $region35: #{mlp_forward.1} parent=0 // pred_check_branch
    %343 = sbr.rel (0) target = $region37
  $region36: #{mlp_forward.1} parent=0 // pred_region
    _
  $region37: #{mlp_forward.1} parent=0 // pred_fallthru
    _

</llo_original>
